<compile_context>
chip_gen: v6e
topology: v6e:2x2x1
jax: 0.10.0
libtpu: 0.0.40
codegen_flags: <defaults>
</compile_context>

<pallas_src>
import jax
import jax.numpy as jnp
from jax.experimental import pallas as pl
from jax.experimental.pallas import tpu as pltpu


def _sin_kernel(x_ref, o_ref):
    # Elementwise sin on the whole VMEM tile. Upcast to f32 for the math path
    # (v5e has no bf16 VPU/EUP datapath); cast back on store.
    x = x_ref[...]
    o_ref[...] = jnp.sin(x.astype(jnp.float32)).astype(o_ref.dtype)


# ~2 MiB per block: reaches the HBM-roofline plateau while keeping the
# double-buffered in+out working set (~8 MiB) well under every generation's
# scoped-VMEM limit (16/32/32 MiB default on v5e/v6e/v7x).
_TARGET_BLOCK_BYTES = 2 * 1024 * 1024

# Minimum grid depth when there is enough work: 2 TensorCores (v7x megacore)
# x ~4 pipelined blocks per core so DMA/compute/writeback actually overlap.
_MIN_GRID_BLOCKS = 8

# Below this the per-pallas_call / per-grid-step overhead dominates the
# memory-bound op; XLA's fused elementwise path is strictly faster.
_SMALL_INPUT_BYTES = 256 * 1024


def _sin_2d(x2d: jax.Array) -> jax.Array:
    """Run the sin kernel over a 2-D (rows, cols) view; cols is a multiple of 128."""
    rows, cols = x2d.shape
    itemsize = jnp.dtype(x2d.dtype).itemsize
    # Sublane packing granularity: 8 rows for 32-bit, 16 for 16-bit, 32 for 8-bit.
    sub = max(8, 8 * (4 // max(1, itemsize)))

    if rows <= sub:
        tile_rows = rows  # full-dim block (always legal)
    else:
        # Size target from bytes ...
        t = max(1, _TARGET_BLOCK_BYTES // (cols * itemsize))
        # ... capped so the grid has >= _MIN_GRID_BLOCKS steps when possible,
        # giving each v7x TensorCore several pipelined blocks.
        t = min(t, pl.cdiv(rows, _MIN_GRID_BLOCKS))
        t = max(sub, (t // sub) * sub)
        tile_rows = min(t, rows)

    grid = (pl.cdiv(rows, tile_rows),)  # ragged final block is masked by Pallas

    block_bytes = tile_rows * cols * itemsize
    # Deterministic double-buffering headroom: 2 input + 2 output buffers plus
    # slack; clamp to [16 MiB, 32 MiB] (v7x has only 64 MiB physical per TC).
    vmem_limit = int(min(32 << 20, max(16 << 20, 8 * block_bytes)))

    return pl.pallas_call(
        _sin_kernel,
        out_shape=jax.ShapeDtypeStruct((rows, cols), x2d.dtype),
        grid=grid,
        in_specs=[pl.BlockSpec((tile_rows, cols), lambda i: (i, 0))],
        out_specs=pl.BlockSpec((tile_rows, cols), lambda i: (i, 0)),
        compiler_params=pltpu.CompilerParams(
            dimension_semantics=("parallel",),
            vmem_limit_bytes=vmem_limit,
        ),
    )(x2d)


def sin_node(x: jax.Array, *, small_input_bytes: int = _SMALL_INPUT_BYTES) -> jax.Array:
    """Pallas equivalent of SINNode.forward: returns sin(x)."""
    # torch.sin promotes integer/bool inputs to floating point; mirror that.
    if not jnp.issubdtype(x.dtype, jnp.floating):
        x = x.astype(jnp.float32)

    orig_shape = x.shape
    n = x.size
    if n == 0:
        return x

    itemsize = jnp.dtype(x.dtype).itemsize
    # Tiny inputs: kernel launch + grid-step overhead dominates; let XLA fuse it.
    if n * itemsize < small_input_bytes:
        return jnp.sin(x)

    # Fast path: find a wide lane width (multiple of 128) dividing the element
    # count. The reshape of the contiguous buffer is then a free metadata op.
    cols = None
    for c in (2048, 1024, 512, 256, 128):
        if n % c == 0:
            cols = c
            break

    if cols is not None:
        y2d = _sin_2d(jnp.reshape(x, (n // cols, cols)))
        return jnp.reshape(y2d, orig_shape)

    # Ragged fallback (n not a multiple of 128): kernel on the 128-aligned
    # prefix, <128-element tail via jnp.sin, then stitch. Avoids the full
    # zero-pad copy + trailing-slice copy of the previous version.
    x_flat = jnp.reshape(x, (-1,))
    n_aligned = (n // 128) * 128
    if n_aligned == 0:
        return jnp.sin(x)
    head = _sin_2d(jnp.reshape(x_flat[:n_aligned], (-1, 128)))
    tail = jnp.sin(x_flat[n_aligned:])
    y_flat = jnp.concatenate([jnp.reshape(head, (-1,)), tail])
    return jnp.reshape(y_flat, orig_shape)


if __name__ == "__main__":
    key = jax.random.PRNGKey(0)

    # Spec-shaped NCHW input; force the Pallas path (default would short-circuit
    # this tiny tensor to jnp.sin) so the kernel itself is exercised.
    x = jax.random.normal(key, (2, 4, 16, 16), dtype=jnp.float32)
    y = sin_node(x, small_input_bytes=0)
    jax.block_until_ready(y)
    assert y.shape == x.shape and y.dtype == x.dtype
    assert jnp.allclose(y, jnp.sin(x), atol=1e-6), "mismatch vs jnp.sin (forced kernel)"

    # Same tensor through the default path (tiny-input short circuit).
    y_small = sin_node(x)
    jax.block_until_ready(y_small)
    assert jnp.allclose(y_small, jnp.sin(x), atol=1e-6), "mismatch (small-input path)"

    # Larger input: exercises the multi-block pipelined path (grid >= 8).
    x2 = jax.random.normal(jax.random.PRNGKey(1), (2, 4, 128, 256), dtype=jnp.float32)
    y2 = sin_node(x2)
    jax.block_until_ready(y2)
    assert jnp.allclose(y2, jnp.sin(x2), atol=1e-6), "mismatch (multi-block path)"

    # Ragged (non-multiple-of-128) fallback: prefix kernel + jnp.sin tail.
    x3 = jax.random.normal(jax.random.PRNGKey(2), (3, 5, 67), dtype=jnp.float32)
    y3 = sin_node(x3, small_input_bytes=0)
    jax.block_until_ready(y3)
    assert jnp.allclose(y3, jnp.sin(x3), atol=1e-6), "mismatch (ragged path)"

    print("KERNEL_OK")
</pallas_src>

<mosaic_0001>
module attributes {stable_mosaic.version = 11 : i64} {
  func.func @_sin_kernel(%arg0: i32, %arg1: memref<1x2048xf32, #tpu.memory_space<vmem>>, %arg2: memref<1x2048xf32, #tpu.memory_space<vmem>>) attributes {dimension_semantics = [#tpu.dimension_semantics<parallel>], iteration_bounds = array<i64: 1>, scalar_prefetch = 0 : i64, scratch_operands = 0 : i64, tpu.core_type = #tpu.core_type<tc>, window_params = [{transform_indices = @transform_0, window_bounds = array<i64: 1, 2048>}, {transform_indices = @transform_1, window_bounds = array<i64: 1, 2048>}]} {
    %c0 = arith.constant 0 : index
    %c0_0 = arith.constant 0 : index
    %0 = vector.load %arg1[%c0, %c0_0] : memref<1x2048xf32, #tpu.memory_space<vmem>>, vector<1x2048xf32>
    %1 = math.sin %0 : vector<1x2048xf32>
    %c0_1 = arith.constant 0 : index
    %c0_2 = arith.constant 0 : index
    %2 = vector.load %arg2[%c0_1, %c0_2] : memref<1x2048xf32, #tpu.memory_space<vmem>>, vector<1x2048xf32>
    tpu.vector_store %arg2[%c0_1, %c0_2], %1 {strides = array<i32>} : memref<1x2048xf32, #tpu.memory_space<vmem>>, vector<1x2048xf32>,
    return
  }
  func.func @transform_0(%arg0: i32) -> (i32, i32) {
    %c0_i32 = arith.constant 0 : i32
    %c0_i32_0 = arith.constant 0 : i32
    return %arg0, %c0_i32 : i32, i32
  }
  func.func @transform_1(%arg0: i32) -> (i32, i32) {
    %c0_i32 = arith.constant 0 : i32
    %c0_i32_0 = arith.constant 0 : i32
    return %arg0, %c0_i32 : i32, i32
  }
}

</mosaic_0001>

<llo_original>
// kernel: tpu_custom_call.1
$region0: #{tpu_custom_call.1}
  #allocation0 [shape = 'u32[]', space=smem, size = 0x4, offset = 0x4, fixed_abs, tag = 'smem constant byte address 0x4 - core index']
  #allocation1 [shape = 'u32[144,128]{1,0:T(1,128)}', space=vmem, size = 0x12000, scoped, tag = 'internal scratch']
  %s0 = inlined_call_operand.hbm [shape: f32[1,2048], index: 0, kind: input, shape index: {}]
  %s1 = inlined_call_operand.hbm [shape: f32[1,2048], index: 1, kind: output, shape index: {}]
  %s2 = sld [smem:[#allocation0]]
  $region18: #{tpu_custom_call.1} parent=0
    _
  %s4 = ssub.s32 1, %s2
  %s5 = scalar_select 0, %s4, %s2
  $region1: #{tpu_custom_call.1} parent=0
    #allocation2 [shape = 'u8[8192]{0}', space=vmem, size = 0x2000, scoped, tag = 'input window, operand 0, single buffered']
    #allocation3 [shape = 's32[1]{0}', space=sflag, size = 0x4, scoped, tag = 'scoped memory for tpu_custom_call.1']
    #allocation4 [shape = 's32[1]{0}', space=sflag, size = 0x4, scoped, tag = 'scoped memory for tpu_custom_call.1']
    #allocation5 [shape = 'u8[8192]{0}', space=vmem, size = 0x2000, scoped, tag = 'output window, operand 0, single buffered']
    %6 = vsyncpa [#allocation3], 0
    %7 = vsyncpa [#allocation4], 0
    // Predicated region
    $region2: #{tpu_custom_call.1} parent=1 // pred_check
      _
    $region3: #{tpu_custom_call.1} parent=1 // pred_check_branch
      %9 = sbr.rel (0) target = $region5
    $region4: #{tpu_custom_call.1} parent=1 // pred_region
      %s11 = ssub.s32 256, 256
      %12 = vsyncadd [#allocation3], %s11
      %s14 = sshll.u32 [#allocation2], 4
      %s15 = int_to_ptr.vmem [resolvable:$true] %s14
      %17 = dma.hbm_to_vmem [thread:$0]  %s0, 256, %s15, [#allocation3]
    $region5: #{tpu_custom_call.1} parent=1 // pred_fallthru
      _
    // Predicated region
    $region6: #{tpu_custom_call.1} parent=1 // pred_check
      _
    $region7: #{tpu_custom_call.1} parent=1 // pred_check_branch
      %19 = sbr.rel (0) target = $region9
    $region8: #{tpu_custom_call.1} parent=1 // pred_region
      %20 = dma.done [#allocation3], 256
    $region9: #{tpu_custom_call.1} parent=1 // pred_fallthru
      _
    %v21 = vld [vmem:[#allocation2] sm:$0xff]
    %v22 = vld [vmem:[#allocation2 + $0x8] sm:$0xff]
    %v23 = vand.u32 2147483647, %v21
    %vm24 = vcmp.le.f32.partialorder %v23, 0.7853982
    %vm25 = vcmp.lt.s32.totalorder %v21, 0
    %v26 = vand.u32 %v21, 2139095040
    %v27 = vshrl.u32 %v26, 23
    %v28 = vsub.s32 %v27, 127
    %v29 = vand.u32 2147483647, %v21
    %v30 = vand.u32 %v29, 8388607
    %v31 = vor.u32 %v30, 8388608
    %v32 = vsub.s32 0, %v31
    %v33 = vadd.s32 %v28, 1
    %vm34 = vcmp.gt.s32.totalorder %v33, 0
    %v35 = vsel %vm34, %v33, 0
    %v36 = vshrl.u32 %v35, 5
    %v37 = vand.u32 %v35, 31
    %v38 = vsub.s32 32, %v37
    %v39 = vshrl.u32 683565275, %v38
    %v40 = vshll.u32 683565275, %v37
    %v41 = vshrl.u32 2475754826, %v38
    %v42 = vor.u32 %v40, %v41
    %v43 = vshll.u32 2475754826, %v37
    %v44 = vshrl.u32 2131351028, %v38
    %v45 = vor.u32 %v43, %v44
    %v46 = vshll.u32 2131351028, %v37
    %v47 = vshrl.u32 2102212464, %v38
    %v48 = vor.u32 %v46, %v47
    %v49 = vshll.u32 2102212464, %v37
    %v50 = vshrl.u32 920167782, %v38
    %v51 = vor.u32 %v49, %v50
    %v52 = vshll.u32 920167782, %v37
    %v53 = vshrl.u32 1326507024, %v38
    %v54 = vor.u32 %v52, %v53
    %vm55 = vcmp.lt.s32.totalorder %v36, 1
    %vm56 = vcmp.lt.s32.totalorder %v36, 2
    %vm57 = vcmp.lt.s32.totalorder %v36, 3
    %vm58 = vcmp.lt.s32.totalorder %v36, 4
    %v59 = vsel %vm55, %v39, %v42
    %v60 = vsel %vm58, %v48, 2102212464
    %v61 = vsel %vm57, %v45, %v60
    %v62 = vsel %vm56, %v59, %v61
    %v63 = vsel %vm55, %v42, %v45
    %v64 = vsel %vm58, %v51, 920167782
    %v65 = vsel %vm57, %v48, %v64
    %v66 = vsel %vm56, %v63, %v65
    %v67 = vsel %vm55, %v45, %v48
    %v68 = vsel %vm58, %v54, 1326507024
    %v69 = vsel %vm57, %v51, %v68
    %v70 = vsel %vm56, %v67, %v69
    %v71 = vshll.u32 %v31, 8
    %v72 = vmul.u32.u64.compose %v71, %v70
    %v73 = vextract.low.u32 %v72
    %v74 = vextract.high.u32 %v72
    %v75 = vmul.u32.u64.compose %v71, %v66
    %v76 = vextract.low.u32 %v75
    %v77 = vextract.high.u32 %v75
    %v78 = vmul.u32 %v71, %v62
    %v79 = vadd.s32 %v74, %v76
    %vm80 = vc.u32 %v74, %v76
    %v81 = vadd.s32 %v77, 1
    %v82 = vsel %vm80, %v81, %v77
    %v83 = vadd.s32 %v78, %v82
    %v84 = vadd.s32 %v83, 536870912
    %v85 = vshrl.u32 %v84, 30
    %v86 = vshll.u32 %v85, 30
    %v87 = vsub.s32 %v83, %v86
    %vm88 = vcmp.lt.s32.totalorder %v87, 0
    %v89 = vsub.s32 0, %v87
    %v90 = vsel %vm88, %v89, %v87
    %v91 = vclz %v90
    %v92 = vsub.s32 %v91, 2
    %vm93 = vcmp.gt.s32.totalorder 0, %v92
    %v94 = vsel %vm93, 0, %v92
    %v95 = vsub.s32 32, %v94
    %v96 = vshll.u32 %v87, %v94
    %v97 = vshrl.u32 %v79, %v95
    %v98 = vor.u32 %v96, %v97
    %v99 = vsub.s32 4294967266, %v94
    %v100 = vadd.s32 %v99, 127
    %v101 = vshll.u32 %v100, 23
    %v102 = vor.u32 4788187, %v101
    %v103 = vand.u32 2147483647, %v102
    %v105 = vcvt.s32.f32 %v98
    %v106 = vmul.f32 %v105, %v103
    %v107 = vxor.u32 %v106, 2147483648
    %v108 = vsel %vm25, %v107, %v106
    %v109 = vsub.s32 4, %v85
    %v110 = vsel %vm25, %v109, %v85
    %v111 = vsel %vm24, %v21, %v108
    %v112 = vsel %vm24, 0, %v110
    %v113 = vcosq.f32.pop %v111
    %v114 = vsinq.f32.pop %v111
    %vm115 = vweird.f32 %v21
    %v116 = vadd.s32 %v112, 3
    %v117 = vand.u32 %v116, 3
    %vm118 = vcmp.lt.s32.totalorder %v117, 2
    %vm119 = vcmp.eq.s32.totalorder %v117, 0
    %v120 = vxor.u32 %v114, 2147483648
    %v121 = vsel %vm119, %v113, %v120
    %vm122 = vcmp.eq.s32.totalorder %v117, 2
    %v123 = vxor.u32 %v113, 2147483648
    %v124 = vsel %vm122, %v123, %v114
    %v125 = vsel %vm118, %v121, %v124
    %v126 = vsel %vm115, nan, %v125
    %v127 = vand.u32 2147483647, %v22
    %vm128 = vcmp.le.f32.partialorder %v127, 0.7853982
    %vm129 = vcmp.lt.s32.totalorder %v22, 0
    %v130 = vand.u32 %v22, 2139095040
    %v131 = vshrl.u32 %v130, 23
    %v132 = vsub.s32 %v131, 127
    %v133 = vand.u32 2147483647, %v22
    %v134 = vand.u32 %v133, 8388607
    %v135 = vor.u32 %v134, 8388608
    %v136 = vsub.s32 0, %v135
    %v137 = vadd.s32 %v132, 1
    %vm138 = vcmp.gt.s32.totalorder %v137, 0
    %v139 = vsel %vm138, %v137, 0
    %v140 = vshrl.u32 %v139, 5
    %v141 = vand.u32 %v139, 31
    %v142 = vsub.s32 32, %v141
    %v143 = vshrl.u32 683565275, %v142
    %v144 = vshll.u32 683565275, %v141
    %v145 = vshrl.u32 2475754826, %v142
    %v146 = vor.u32 %v144, %v145
    %v147 = vshll.u32 2475754826, %v141
    %v148 = vshrl.u32 2131351028, %v142
    %v149 = vor.u32 %v147, %v148
    %v150 = vshll.u32 2131351028, %v141
    %v151 = vshrl.u32 2102212464, %v142
    %v152 = vor.u32 %v150, %v151
    %v153 = vshll.u32 2102212464, %v141
    %v154 = vshrl.u32 920167782, %v142
    %v155 = vor.u32 %v153, %v154
    %v156 = vshll.u32 920167782, %v141
    %v157 = vshrl.u32 1326507024, %v142
    %v158 = vor.u32 %v156, %v157
    %vm159 = vcmp.lt.s32.totalorder %v140, 1
    %vm160 = vcmp.lt.s32.totalorder %v140, 2
    %vm161 = vcmp.lt.s32.totalorder %v140, 3
    %vm162 = vcmp.lt.s32.totalorder %v140, 4
    %v163 = vsel %vm159, %v143, %v146
    %v164 = vsel %vm162, %v152, 2102212464
    %v165 = vsel %vm161, %v149, %v164
    %v166 = vsel %vm160, %v163, %v165
    %v167 = vsel %vm159, %v146, %v149
    %v168 = vsel %vm162, %v155, 920167782
    %v169 = vsel %vm161, %v152, %v168
    %v170 = vsel %vm160, %v167, %v169
    %v171 = vsel %vm159, %v149, %v152
    %v172 = vsel %vm162, %v158, 1326507024
    %v173 = vsel %vm161, %v155, %v172
    %v174 = vsel %vm160, %v171, %v173
    %v175 = vshll.u32 %v135, 8
    %v176 = vmul.u32.u64.compose %v175, %v174
    %v177 = vextract.low.u32 %v176
    %v178 = vextract.high.u32 %v176
    %v179 = vmul.u32.u64.compose %v175, %v170
    %v180 = vextract.low.u32 %v179
    %v181 = vextract.high.u32 %v179
    %v182 = vmul.u32 %v175, %v166
    %v183 = vadd.s32 %v178, %v180
    %vm184 = vc.u32 %v178, %v180
    %v185 = vadd.s32 %v181, 1
    %v186 = vsel %vm184, %v185, %v181
    %v187 = vadd.s32 %v182, %v186
    %v188 = vadd.s32 %v187, 536870912
    %v189 = vshrl.u32 %v188, 30
    %v190 = vshll.u32 %v189, 30
    %v191 = vsub.s32 %v187, %v190
    %vm192 = vcmp.lt.s32.totalorder %v191, 0
    %v193 = vsub.s32 0, %v191
    %v194 = vsel %vm192, %v193, %v191
    %v195 = vclz %v194
    %v196 = vsub.s32 %v195, 2
    %vm197 = vcmp.gt.s32.totalorder 0, %v196
    %v198 = vsel %vm197, 0, %v196
    %v199 = vsub.s32 32, %v198
    %v200 = vshll.u32 %v191, %v198
    %v201 = vshrl.u32 %v183, %v199
    %v202 = vor.u32 %v200, %v201
    %v203 = vsub.s32 4294967266, %v198
    %v204 = vadd.s32 %v203, 127
    %v205 = vshll.u32 %v204, 23
    %v206 = vor.u32 4788187, %v205
    %v207 = vand.u32 2147483647, %v206
    %v209 = vcvt.s32.f32 %v202
    %v210 = vmul.f32 %v209, %v207
    %v211 = vxor.u32 %v210, 2147483648
    %v212 = vsel %vm129, %v211, %v210
    %v213 = vsub.s32 4, %v189
    %v214 = vsel %vm129, %v213, %v189
    %v215 = vsel %vm128, %v22, %v212
    %v216 = vsel %vm128, 0, %v214
    %v217 = vcosq.f32.pop %v215
    %v218 = vsinq.f32.pop %v215
    %vm219 = vweird.f32 %v22
    %v220 = vadd.s32 %v216, 3
    %v221 = vand.u32 %v220, 3
    %vm222 = vcmp.lt.s32.totalorder %v221, 2
    %vm223 = vcmp.eq.s32.totalorder %v221, 0
    %v224 = vxor.u32 %v218, 2147483648
    %v225 = vsel %vm223, %v217, %v224
    %vm226 = vcmp.eq.s32.totalorder %v221, 2
    %v227 = vxor.u32 %v217, 2147483648
    %v228 = vsel %vm226, %v227, %v218
    %v229 = vsel %vm222, %v225, %v228
    %v230 = vsel %vm219, nan, %v229
    %231 = vst [vmem:[#allocation5] sm:$0xff] %v126
    %232 = vst [vmem:[#allocation5 + $0x8] sm:$0xff] %v230
    // Predicated region
    $region10: #{tpu_custom_call.1} parent=1 // pred_check
      _
    $region11: #{tpu_custom_call.1} parent=1 // pred_check_branch
      %234 = sbr.rel (0) target = $region13
    $region12: #{tpu_custom_call.1} parent=1 // pred_region
      %s236 = ssub.s32 256, 256
      %237 = vsyncadd [#allocation4], %s236
      %s239 = sshll.u32 [#allocation5], 4
      %s240 = int_to_ptr.vmem [resolvable:$true] %s239
      %242 = dma.vmem_to_hbm [thread:$0]  %s240, 256, %s1, [#allocation4]
    $region13: #{tpu_custom_call.1} parent=1 // pred_fallthru
      _
    // Predicated region
    $region14: #{tpu_custom_call.1} parent=1 // pred_check
      _
    $region15: #{tpu_custom_call.1} parent=1 // pred_check_branch
      %244 = sbr.rel (0) target = $region17
    $region16: #{tpu_custom_call.1} parent=1 // pred_region
      %245 = dma.done [#allocation4], 256
    $region17: #{tpu_custom_call.1} parent=1 // pred_fallthru
      _
    %246 = vsyncpa [#allocation3], 1
    %247 = vsyncpa [#allocation4], 1

</llo_original>
